<compile_context>
chip_gen: v5e
topology: v5e:2x2
jax: 0.10.0
libtpu: 0.0.40
codegen_flags: <defaults>
</compile_context>

<pallas_src>
import jax
import jax.numpy as jnp
from jax.experimental import pallas as pl
from jax.experimental.pallas import tpu as pltpu


# Lane-block cap: safe for v5e / v6e / v7x scoped-VMEM defaults while still
# amortizing the ~0.35 us per-grid-step overhead.
_MAX_LANE_BLOCK = 32768


def _mlp_kernel(params_ref, x_ref, o_ref):
    # params_ref: (3H+1, 1) packed [w1; b1; w2; b2]  (resident across the grid)
    # x_ref, o_ref: (1, Nb) lane-dense batch blocks.
    H = (params_ref.shape[0] - 1) // 3
    w1 = params_ref[0:H, :]              # (H, 1)
    b1 = params_ref[H:2 * H, :]          # (H, 1)
    w2 = params_ref[2 * H:3 * H, :]      # (H, 1)
    b2 = params_ref[3 * H:3 * H + 1, :]  # (1, 1)

    x = x_ref[...]                                        # (1, Nb)
    # hidden = relu(W1 @ x + b1): F == 1 -> VPU broadcast multiply + add + max.
    h = jnp.maximum(w1 * x + b1, 0.0)                     # (H, Nb)
    # out = W2 @ hidden + b2: O == 1 -> weighted sublane reduction over H.
    y = jnp.sum(h * w2, axis=0, keepdims=True)            # (1, Nb)
    o_ref[...] = y + b2                                   # lane-dense store


@jax.jit
def net_forward(x, w1, b1, w2, b2):
    """Forward pass of Net: Linear(F->H) -> ReLU -> Linear(H->O), F = O = 1.

    x  : (N, 1)  (batch of scalar inputs, PyTorch convention)
    w1 : (H, 1)  == PyTorch hidden.weight   (num_hidden, input_feature)
    b1 : (H, 1)  == PyTorch hidden.bias as a column
    w2 : (H, 1)  == PyTorch out.weight.T    (out.weight is (1, H))
    b2 : (1, 1)  == PyTorch out.bias
    returns (N, 1)
    """
    N, F = x.shape
    H = w1.shape[0]
    assert F == 1, "kernel is specialized for input_feature == 1"
    assert w1.shape == (H, 1) and b1.shape == (H, 1)
    assert w2.shape == (H, 1) and b2.shape == (1, 1)
    dtype = x.dtype

    # One packed parameter operand: [w1; b1; w2; b2] -> (3H+1, 1), single DMA.
    params = jnp.concatenate([w1, b1, w2, b2], axis=0).astype(dtype)

    # (N, 1) -> (1, N) is a pure bitcast (row-major), not a transpose HLO.
    xT = jnp.reshape(x, (1, N))

    # Pad batch to a multiple of 128 lanes (unmasked vst), then to a multiple
    # of the lane block so the grid divides evenly.
    n128 = -(-N // 128) * 128
    nb = min(n128, _MAX_LANE_BLOCK)
    n_pad = -(-n128 // nb) * nb
    if n_pad != N:
        xT = jnp.pad(xT, ((0, 0), (0, n_pad - N)))

    grid = (n_pad // nb,)
    yT = pl.pallas_call(
        _mlp_kernel,
        out_shape=jax.ShapeDtypeStruct((1, n_pad), dtype),
        grid=grid,
        in_specs=[
            # Params: full array, constant index map -> stays resident in VMEM.
            pl.BlockSpec((3 * H + 1, 1), lambda i: (0, 0)),
            # Batch: lane-dense (1, nb) blocks, pipelined across the grid.
            pl.BlockSpec((1, nb), lambda i: (0, i)),
        ],
        out_specs=pl.BlockSpec((1, nb), lambda i: (0, i)),
        compiler_params=pltpu.CompilerParams(
            dimension_semantics=("parallel",),  # lets v7x split N across 2 TCs
        ),
    )(params, xT)

    # Drop padding, back to (N, 1) via bitcast-reshape.
    return jnp.reshape(yT[:, :N], (N, 1))


def init_params(key, input_feature, num_hidden, outputs):
    """Deterministic init mimicking PyTorch nn.Linear (uniform +/- 1/sqrt(fan_in))."""
    assert input_feature == 1 and outputs == 1
    k1, k2, k3, k4 = jax.random.split(key, 4)
    bound1 = 1.0 / jnp.sqrt(jnp.float32(input_feature))
    bound2 = 1.0 / jnp.sqrt(jnp.float32(num_hidden))
    # Stored directly in the kernel-friendly column layout (see net_forward).
    w1 = jax.random.uniform(k1, (num_hidden, input_feature), jnp.float32, -bound1, bound1)
    b1 = jax.random.uniform(k2, (num_hidden, 1), jnp.float32, -bound1, bound1)
    w2 = jax.random.uniform(k3, (num_hidden, outputs), jnp.float32, -bound2, bound2)
    b2 = jax.random.uniform(k4, (1, outputs), jnp.float32, -bound2, bound2)
    return w1, b1, w2, b2


if __name__ == "__main__":
    # Net(input_feature=1, num_hidden=32, outputs=1); the reference script feeds
    # linspace(-3, 3) unsqueezed to shape [N, 1]. Use a small N here.
    input_feature, num_hidden, outputs = 1, 32, 1
    N = 256

    key = jax.random.PRNGKey(0)
    kx, kp = jax.random.split(key)
    x = jnp.linspace(-3.0, 3.0, N, dtype=jnp.float32).reshape(N, 1)
    w1, b1, w2, b2 = init_params(kp, input_feature, num_hidden, outputs)

    y = net_forward(x, w1, b1, w2, b2)
    y = jax.block_until_ready(y)

    # Pure-JAX reference (PyTorch semantics: relu(x @ W1^T + b1) @ W2^T + b2).
    ref = jnp.maximum(x @ w1.T + b1.T, 0.0) @ w2 + b2
    assert y.shape == (N, outputs)
    assert jnp.allclose(y, ref, atol=1e-5, rtol=1e-5), "mismatch vs reference"
    print("KERNEL_OK")
</pallas_src>

<mosaic_0001>
module attributes {stable_mosaic.version = 11 : i64} {
  func.func @_mlp_kernel(%arg0: i32, %arg1: memref<97x1xf32, #tpu.memory_space<vmem>>, %arg2: memref<1x256xf32, #tpu.memory_space<vmem>>, %arg3: memref<1x256xf32, #tpu.memory_space<vmem>>) attributes {dimension_semantics = [#tpu.dimension_semantics<parallel>], iteration_bounds = array<i64: 1>, scalar_prefetch = 0 : i64, scratch_operands = 0 : i64, tpu.core_type = #tpu.core_type<tc>, window_params = [{pipeline_mode = #tpu.pipeline_mode<synchronous>, transform_indices = @transform_0, window_bounds = array<i64: 97, 1>}, {transform_indices = @transform_1, window_bounds = array<i64: 1, 256>}, {transform_indices = @transform_2, window_bounds = array<i64: 1, 256>}]} {
    %c0 = arith.constant 0 : index
    %c0_0 = arith.constant 0 : index
    %0 = vector.load %arg1[%c0, %c0_0] : memref<97x1xf32, #tpu.memory_space<vmem>>, vector<32x1xf32>
    %c32 = arith.constant 32 : index
    %c0_1 = arith.constant 0 : index
    %1 = vector.load %arg1[%c32, %c0_1] : memref<97x1xf32, #tpu.memory_space<vmem>>, vector<32x1xf32>
    %c64 = arith.constant 64 : index
    %c0_2 = arith.constant 0 : index
    %2 = vector.load %arg1[%c64, %c0_2] : memref<97x1xf32, #tpu.memory_space<vmem>>, vector<32x1xf32>
    %c96 = arith.constant 96 : index
    %c0_3 = arith.constant 0 : index
    %3 = vector.load %arg1[%c96, %c0_3] : memref<97x1xf32, #tpu.memory_space<vmem>>, vector<1x1xf32>
    %c0_4 = arith.constant 0 : index
    %c0_5 = arith.constant 0 : index
    %4 = vector.load %arg2[%c0_4, %c0_5] : memref<1x256xf32, #tpu.memory_space<vmem>>, vector<1x256xf32>
    %5 = vector.broadcast %0 : vector<32x1xf32> to vector<32x256xf32>
    %6 = vector.broadcast %4 : vector<1x256xf32> to vector<32x256xf32>
    %7 = arith.mulf %5, %6 : vector<32x256xf32>
    %8 = vector.broadcast %1 : vector<32x1xf32> to vector<32x256xf32>
    %9 = arith.addf %7, %8 : vector<32x256xf32>
    %cst = arith.constant 0.000000e+00 : f32
    %10 = vector.broadcast %cst : f32 to vector<32x256xf32>
    %11 = arith.maximumf %9, %10 : vector<32x256xf32>
    %12 = vector.broadcast %2 : vector<32x1xf32> to vector<32x256xf32>
    %13 = arith.mulf %11, %12 : vector<32x256xf32>
    %cst_6 = arith.constant dense<0.000000e+00> : vector<256xf32>
    %14 = vector.multi_reduction <add>, %13, %cst_6 [0] : vector<32x256xf32> to vector<256xf32>
    %15 = vector.shape_cast %14 : vector<256xf32> to vector<1x256xf32>
    %16 = vector.broadcast %3 : vector<1x1xf32> to vector<1x256xf32>
    %17 = arith.addf %15, %16 : vector<1x256xf32>
    %c0_7 = arith.constant 0 : index
    %c0_8 = arith.constant 0 : index
    %18 = vector.load %arg3[%c0_7, %c0_8] : memref<1x256xf32, #tpu.memory_space<vmem>>, vector<1x256xf32>
    tpu.vector_store %arg3[%c0_7, %c0_8], %17 {strides = array<i32>} : memref<1x256xf32, #tpu.memory_space<vmem>>, vector<1x256xf32>,
    return
  }
  func.func @transform_0(%arg0: i32) -> (i32, i32) {
    %c0_i32 = arith.constant 0 : i32
    %c0_i32_0 = arith.constant 0 : i32
    %c0_i32_1 = arith.constant 0 : i32
    return %c0_i32, %c0_i32_0 : i32, i32
  }
  func.func @transform_1(%arg0: i32) -> (i32, i32) {
    %c0_i32 = arith.constant 0 : i32
    %c0_i32_0 = arith.constant 0 : i32
    return %c0_i32, %arg0 : i32, i32
  }
  func.func @transform_2(%arg0: i32) -> (i32, i32) {
    %c0_i32 = arith.constant 0 : i32
    %c0_i32_0 = arith.constant 0 : i32
    return %c0_i32, %arg0 : i32, i32
  }
}

</mosaic_0001>

<llo_original>
// kernel: net_forward.1
$region0: #{net_forward.1}
  #allocation0 [shape = 'u32[]', space=smem, size = 0x4, offset = 0x4, fixed_abs, tag = 'smem constant byte address 0x4 - core index']
  #allocation1 [shape = 'u32[72,128]{1,0:T(1,128)}', space=vmem, size = 0x9000, scoped, tag = 'internal scratch']
  %s0 = inlined_call_operand.vmem [shape: f32[97,1], index: 0, kind: input, shape index: {}]
  %s1 = inlined_call_operand.vmem [shape: f32[1,256], index: 1, kind: input, shape index: {}]
  %s2 = inlined_call_operand.hbm [shape: f32[1,256], index: 2, kind: output, shape index: {}]
  %s3 = sld [smem:[#allocation0]]
  $region18: #{net_forward.1} parent=0
    _
  %s5 = ssub.s32 1, %s3
  %s6 = scalar_select 0, %s5, %s3
  $region1: #{net_forward.1} parent=0
    #allocation2 [shape = 'u8[1024]{0}', space=vmem, size = 0x400, scoped, tag = 'output window, operand 0, single buffered']
    #allocation3 [shape = 's32[1]{0}', space=sflag, size = 0x4, scoped, tag = 'scoped memory for net_forward.1']
    %7 = vsyncpa [#allocation3], 0
    // Predicated region
    $region2: #{net_forward.1} parent=1 // pred_check
      _
    $region3: #{net_forward.1} parent=1 // pred_check_branch
      %9 = sbr.rel (0) target = $region5
    $region4: #{net_forward.1} parent=1 // pred_region
      _
    $region5: #{net_forward.1} parent=1 // pred_fallthru
      _
    // Predicated region
    $region6: #{net_forward.1} parent=1 // pred_check
      _
    $region7: #{net_forward.1} parent=1 // pred_check_branch
      %11 = sbr.rel (0) target = $region9
    $region8: #{net_forward.1} parent=1 // pred_region
      _
    $region9: #{net_forward.1} parent=1 // pred_fallthru
      _
    %v12 = vld [vmem:[%s0] sm:$0xff]
    %v13 = vld [vmem:[%s0 + $0x8] sm:$0xff]
    %v14 = vld [vmem:[%s0 + $0x10] sm:$0xff]
    %v15 = vld [vmem:[%s0 + $0x18] sm:$0xff]
    %v16 = vld [vmem:[%s0 + $0x20] sm:$0xff]
    %v17 = vld [vmem:[%s0 + $0x28] sm:$0xff]
    %v18 = vld [vmem:[%s0 + $0x30] sm:$0xff]
    %v19 = vld [vmem:[%s0 + $0x38] sm:$0xff]
    %v20 = vld [vmem:[%s0 + $0x40] sm:$0xff]
    %v21 = vld [vmem:[%s0 + $0x48] sm:$0xff]
    %v22 = vld [vmem:[%s0 + $0x50] sm:$0xff]
    %v23 = vld [vmem:[%s0 + $0x58] sm:$0xff]
    %v24 = vld [vmem:[%s0 + $0x60] sm:$0x1]
    %v25 = vld [vmem:[%s1] sm:$0x3]
    %27 = vset.pattern.permute.xlu0 0
    %28 = vperm.xlu0 %27, %v12
    %v29 = vpop.permute.xlu0 %28
    %32 = vset.pattern.permute.xlu0 0
    %33 = vperm.xlu0 %32, %v13
    %v34 = vpop.permute.xlu0 %33
    %37 = vset.pattern.permute.xlu0 0
    %38 = vperm.xlu0 %37, %v14
    %v39 = vpop.permute.xlu0 %38
    %42 = vset.pattern.permute.xlu0 0
    %43 = vperm.xlu0 %42, %v15
    %v44 = vpop.permute.xlu0 %43
    %v47 = vperm.slane %v25, 0
    %v48 = vperm.slane %v25, 1
    %v51 = vmul.f32 %v29, %v47
    %v52 = vmul.f32 %v29, %v48
    %v53 = vmul.f32 %v34, %v47
    %v54 = vmul.f32 %v34, %v48
    %v55 = vmul.f32 %v39, %v47
    %v56 = vmul.f32 %v39, %v48
    %v57 = vmul.f32 %v44, %v47
    %v58 = vmul.f32 %v44, %v48
    %60 = vset.pattern.permute.xlu0 0
    %61 = vperm.xlu0 %60, %v16
    %v62 = vpop.permute.xlu0 %61
    %65 = vset.pattern.permute.xlu0 0
    %66 = vperm.xlu0 %65, %v17
    %v67 = vpop.permute.xlu0 %66
    %70 = vset.pattern.permute.xlu0 0
    %71 = vperm.xlu0 %70, %v18
    %v72 = vpop.permute.xlu0 %71
    %75 = vset.pattern.permute.xlu0 0
    %76 = vperm.xlu0 %75, %v19
    %v77 = vpop.permute.xlu0 %76
    %v79 = vadd.f32 %v51, %v62
    %v80 = vadd.f32 %v52, %v62
    %v81 = vadd.f32 %v53, %v67
    %v82 = vadd.f32 %v54, %v67
    %v83 = vadd.f32 %v55, %v72
    %v84 = vadd.f32 %v56, %v72
    %v85 = vadd.f32 %v57, %v77
    %v86 = vadd.f32 %v58, %v77
    %v87 = vmax.f32 %v79, 0.0
    %v88 = vmax.f32 %v80, 0.0
    %v89 = vmax.f32 %v81, 0.0
    %v90 = vmax.f32 %v82, 0.0
    %v91 = vmax.f32 %v83, 0.0
    %v92 = vmax.f32 %v84, 0.0
    %v93 = vmax.f32 %v85, 0.0
    %v94 = vmax.f32 %v86, 0.0
    %96 = vset.pattern.permute.xlu0 0
    %97 = vperm.xlu0 %96, %v20
    %v98 = vpop.permute.xlu0 %97
    %101 = vset.pattern.permute.xlu0 0
    %102 = vperm.xlu0 %101, %v21
    %v103 = vpop.permute.xlu0 %102
    %106 = vset.pattern.permute.xlu0 0
    %107 = vperm.xlu0 %106, %v22
    %v108 = vpop.permute.xlu0 %107
    %111 = vset.pattern.permute.xlu0 0
    %112 = vperm.xlu0 %111, %v23
    %v113 = vpop.permute.xlu0 %112
    %v115 = vmul.f32 %v87, %v98
    %v116 = vmul.f32 %v88, %v98
    %v117 = vmul.f32 %v89, %v103
    %v118 = vmul.f32 %v90, %v103
    %v119 = vmul.f32 %v91, %v108
    %v120 = vmul.f32 %v92, %v108
    %v121 = vmul.f32 %v93, %v113
    %v122 = vmul.f32 %v94, %v113
    %v123 = vadd.f32 %v115, %v117
    %v124 = vadd.f32 %v123, %v119
    %v125 = vadd.f32 %v124, %v121
    %v126 = vrot.slane %v125, 4
    %v127 = vadd.f32 %v125, %v126
    %v128 = vrot.slane %v127, 2
    %v129 = vadd.f32 %v127, %v128
    %v130 = vrot.slane %v129, 1
    %v131 = vadd.f32 %v129, %v130
    %v132 = vadd.f32 %v116, %v118
    %v133 = vadd.f32 %v132, %v120
    %v134 = vadd.f32 %v133, %v122
    %v135 = vrot.slane %v134, 4
    %v136 = vadd.f32 %v134, %v135
    %v137 = vrot.slane %v136, 2
    %v138 = vadd.f32 %v136, %v137
    %v139 = vrot.slane %v138, 1
    %v140 = vadd.f32 %v138, %v139
    %142 = vset.pattern.permute.xlu0 0
    %143 = vperm.xlu0 %142, %v24
    %v144 = vpop.permute.xlu0 %143
    %v146 = vadd.f32 %v131, %v144
    %v147 = vadd.f32 %v140, %v144
    %v150 = vrot.slane %v147, 7
    %vm151 = vcmask 1040384
    %v152 = vsel %vm151, %v146, %v150
    %v154 = vlaneseq
    %vm155 = vcmp.ge.s32.totalorder %v154, 0
    %vm156 = vcmp.lt.s32.totalorder %v154, 256
    %vm157 = vmand %vm155, %vm156
    %158 = vst.msk [vmem:[#allocation2] sm:$0x3] %vm157, %v152
    // Predicated region
    $region10: #{net_forward.1} parent=1 // pred_check
      _
    $region11: #{net_forward.1} parent=1 // pred_check_branch
      %160 = sbr.rel (0) target = $region13
    $region12: #{net_forward.1} parent=1 // pred_region
      %162 = vsyncadd [#allocation3], 0
      %s164 = sshll.u32 [#allocation2], 4
      %s165 = int_to_ptr.vmem [resolvable:$true] %s164
      %s166 = sshll.u32 %s2, 4
      %s167 = int_to_ptr.hbm [resolvable:$true] %s166
      %169 = dma.vmem_to_hbm [thread:$0]  %s165, 32, %s167, [#allocation3]
    $region13: #{net_forward.1} parent=1 // pred_fallthru
      _
    // Predicated region
    $region14: #{net_forward.1} parent=1 // pred_check
      _
    $region15: #{net_forward.1} parent=1 // pred_check_branch
      %171 = sbr.rel (0) target = $region17
    $region16: #{net_forward.1} parent=1 // pred_region
      %173 = dma.done [#allocation3], 32
    $region17: #{net_forward.1} parent=1 // pred_fallthru
      _
    %174 = vsyncpa [#allocation3], 1

</llo_original>
